<compile_context>
chip_gen: v6e
topology: v6e:2x2x1
jax: 0.10.0
libtpu: 0.0.40
codegen_flags: <defaults>
</compile_context>

<pallas_src>
import jax
import jax.numpy as jnp
from jax.experimental import pallas as pl
from jax.experimental.pallas import tpu as pltpu

ACT_BITS = 24      # brevitas QuantIdentity(act_bit_width=24, Int8ActPerTensorFixedPoint)
WEIGHT_BITS = 8    # QuantLinear(weight_bit_width=8)


def _fake_quant(x, inv_scale, scale, bits):
    """Symmetric per-tensor fake quantization (quantize -> clamp -> dequantize).

    Uses a precomputed reciprocal scale (power-of-two fixed-point scale -> exact).
    Keep this arithmetic in f32: 24-bit quant sits at the edge of the f32 mantissa.
    """
    qmax = float(2 ** (bits - 1) - 1)
    qmin = -float(2 ** (bits - 1))
    q = jnp.clip(jnp.round(x * inv_scale), qmin, qmax)
    return q * scale


def ahpc_kernel(params_ref, x_ref, w_in_ref, w_out_ref, mem0_ref,
                out_ref, mem_out_ref, mem_sc):
    t = pl.program_id(0)

    # scalar (learnable in the torch module) parameters live in SMEM
    beta = params_ref[0]
    vth = params_ref[1]
    inv_act_scale = params_ref[2]
    act_scale = params_ref[3]
    inv_out_scale = params_ref[4]
    out_scale = params_ref[5]
    w_out_scale = params_ref[6]   # per-tensor int8 weight scale of output_dense

    # Initialize the resident membrane accumulator from the provided state.
    @pl.when(t == 0)
    def _():
        mem_sc[...] = mem0_ref[...]

    x = x_ref[0]                                           # (B, F) current step

    # input_dense (weights fake-quantized + transposed once in the wrapper)
    h = jnp.dot(x, w_in_ref[...], preferred_element_type=jnp.float32)

    # dropout(p=0.0) -> identity at inference

    # activation_quant: 24-bit fixed-point fake quant
    h = _fake_quant(h, inv_act_scale, act_scale, ACT_BITS)

    # snn.Leaky: mem = beta*mem + input ; spk = heaviside(mem - threshold)
    mem = beta * mem_sc[...] + h
    spiked = mem > vth
    # reset_mechanism='zero', reset_delay=False -> zero membrane where it spiked
    mem_sc[...] = jnp.where(spiked, 0.0, mem)

    # output_dense: spk (0/1) and int8-grid weights are exact in bf16 -> bf16 MXU,
    # then apply the per-tensor weight scale to the f32 accumulator.
    spk = spiked.astype(jnp.bfloat16)
    o = jnp.dot(spk, w_out_ref[...], preferred_element_type=jnp.float32)
    o = o * w_out_scale

    # out_quant: 24-bit fixed-point fake quant
    out_ref[0] = _fake_quant(o, inv_out_scale, out_scale, ACT_BITS)

    # Emit the final (post-reset) membrane state once, at the last step.
    @pl.when(t == pl.num_programs(0) - 1)
    def _():
        mem_out_ref[...] = mem_sc[...]


def _quantize_weight_per_tensor(w, bits=WEIGHT_BITS):
    """int8 per-tensor symmetric weight quant. Returns (integer grid, scale)."""
    qmax = float(2 ** (bits - 1) - 1)
    scale = jnp.maximum(jnp.max(jnp.abs(w)), 1e-12) / qmax
    q = jnp.clip(jnp.round(w / scale), -qmax, qmax)
    return q, scale


def prepare_ahpc_block(w_in, w_out, beta, vth, act_scale, out_scale):
    """One-time parameter preparation (hoisted out of the per-step path).

    w_in/w_out come in PyTorch (out_features, in_features) layout.
    Returns (w_in_q, w_out_q, params) ready for the kernel:
      w_in_q : (in, out) f32  -- fake-quantized weight (q * scale)
      w_out_q: (in, out) bf16 -- int8-grid integer values (exact in bf16)
      params : (7,) f32 scalar vector for SMEM
    """
    q_in, s_in = _quantize_weight_per_tensor(w_in)
    q_out, s_out = _quantize_weight_per_tensor(w_out)
    w_in_q = (q_in * s_in).T.astype(jnp.float32)
    w_out_q = q_out.T.astype(jnp.bfloat16)     # integers in [-127,127]: exact in bf16
    params = jnp.stack([
        jnp.asarray(beta, jnp.float32),
        jnp.asarray(vth, jnp.float32),
        jnp.asarray(1.0 / act_scale, jnp.float32),
        jnp.asarray(act_scale, jnp.float32),
        jnp.asarray(1.0 / out_scale, jnp.float32),
        jnp.asarray(out_scale, jnp.float32),
        s_out.astype(jnp.float32),
    ]).astype(jnp.float32)
    return w_in_q, w_out_q, params


def quant_ahpc_rollout(xs, mem0, w_in_q, w_out_q, params):
    """Run the full T-step recurrence in a single pallas_call.

    xs: (T, B, F) f32 input sequence; mem0: (B, F) f32 initial membrane.
    Returns (out_seq (T,B,F) f32, mem_final (B,F) f32).
    """
    T, B, F = xs.shape

    # Pad batch to a multiple of 8 (f32 sublane tile) -> unmasked vector stores.
    B_pad = ((B + 7) // 8) * 8
    if B_pad != B:
        xs = jnp.pad(xs, ((0, 0), (0, B_pad - B), (0, 0)))
        mem0 = jnp.pad(mem0, ((0, B_pad - B), (0, 0)))

    out_seq, mem_final = pl.pallas_call(
        ahpc_kernel,
        out_shape=(
            jax.ShapeDtypeStruct((T, B_pad, F), jnp.float32),
            jax.ShapeDtypeStruct((B_pad, F), jnp.float32),
        ),
        grid=(T,),
        in_specs=[
            pl.BlockSpec(memory_space=pltpu.MemorySpace.SMEM),     # scalar params
            pl.BlockSpec((1, B_pad, F), lambda t: (t, 0, 0)),      # x_t (streamed)
            pl.BlockSpec((F, F), lambda t: (0, 0)),                # w_in (resident)
            pl.BlockSpec((F, F), lambda t: (0, 0)),                # w_out (resident, bf16)
            pl.BlockSpec((B_pad, F), lambda t: (0, 0)),            # mem0 (resident)
        ],
        out_specs=(
            pl.BlockSpec((1, B_pad, F), lambda t: (t, 0, 0)),      # out_t
            pl.BlockSpec((B_pad, F), lambda t: (0, 0)),            # final membrane
        ),
        scratch_shapes=[pltpu.VMEM((B_pad, F), jnp.float32)],      # membrane carry
        input_output_aliases={4: 1},                               # mem0 -> mem_final (in-place)
        compiler_params=pltpu.CompilerParams(
            dimension_semantics=("arbitrary",),                    # time is a recurrence
        ),
    )(params, xs, w_in_q, w_out_q, mem0)

    if B_pad != B:
        out_seq = out_seq[:, :B, :]
        mem_final = mem_final[:B, :]
    return out_seq, mem_final


if __name__ == "__main__":
    key = jax.random.PRNGKey(0)
    k1, k2, k3 = jax.random.split(key, 3)

    # small (time, batch, features); batch is a multiple of 8, features = QuantLinear(features, features)
    T, B, F = 8, 8, 128

    xs = jax.random.normal(k1, (T, B, F), dtype=jnp.float32)
    w_in = jax.random.normal(k2, (F, F), dtype=jnp.float32) / jnp.sqrt(F)
    w_out = jax.random.normal(k3, (F, F), dtype=jnp.float32) / jnp.sqrt(F)
    mem0 = jnp.zeros((B, F), dtype=jnp.float32)   # fresh hidden state (reset_hidden)

    beta = 0.9               # Leaky decay (learnable scalar in torch module)
    vth = 0.5                # threshold (learnable scalar)
    act_scale = 2.0 ** -16   # fixed-point (power-of-two) activation-quant scale
    out_scale = 2.0 ** -16   # fixed-point output-quant scale
    # TODO(synk): brevitas learns these activation scales from data statistics; here they
    # are deterministic synthetic constants.

    # One-time weight fake-quantization / transpose (hoisted out of the step loop).
    w_in_q, w_out_q, params = prepare_ahpc_block(w_in, w_out, beta, vth, act_scale, out_scale)

    out_seq, mem_final = quant_ahpc_rollout(xs, mem0, w_in_q, w_out_q, params)
    jax.block_until_ready((out_seq, mem_final))
    assert out_seq.shape == (T, B, F) and out_seq.dtype == jnp.float32
    assert mem_final.shape == (B, F) and mem_final.dtype == jnp.float32
    print("KERNEL_OK")
</pallas_src>

<mosaic_0001>
module attributes {stable_mosaic.version = 11 : i64} {
  func.func @ahpc_kernel(%arg0: i32, %arg1: memref<7xf32, #tpu.memory_space<smem>>, %arg2: memref<1x8x128xf32, #tpu.memory_space<vmem>>, %arg3: memref<128x128xf32, #tpu.memory_space<vmem>>, %arg4: memref<128x128xbf16, #tpu.memory_space<vmem>>, %arg5: memref<8x128xf32, #tpu.memory_space<vmem>>, %arg6: memref<1x8x128xf32, #tpu.memory_space<vmem>>, %arg7: memref<8x128xf32, #tpu.memory_space<vmem>>, %arg8: memref<8x128xf32, #tpu.memory_space<vmem>>) attributes {dimension_semantics = [#tpu.dimension_semantics<arbitrary>], iteration_bounds = array<i64: 8>, scalar_prefetch = 0 : i64, scratch_operands = 1 : i64, tpu.core_type = #tpu.core_type<tc>, window_params = [{transform_indices = @transform_0, window_bounds = array<i64: 7>}, {transform_indices = @transform_1, window_bounds = array<i64: 1, 8, 128>}, {pipeline_mode = #tpu.pipeline_mode<synchronous>, transform_indices = @transform_2, window_bounds = array<i64: 128, 128>}, {pipeline_mode = #tpu.pipeline_mode<synchronous>, transform_indices = @transform_3, window_bounds = array<i64: 128, 128>}, {pipeline_mode = #tpu.pipeline_mode<synchronous>, transform_indices = @transform_4, window_bounds = array<i64: 8, 128>}, {transform_indices = @transform_5, window_bounds = array<i64: 1, 8, 128>}, {pipeline_mode = #tpu.pipeline_mode<synchronous>, transform_indices = @transform_6, window_bounds = array<i64: 8, 128>}]} {
    %c0 = arith.constant 0 : index
    %0 = memref.load %arg1[%c0] : memref<7xf32, #tpu.memory_space<smem>>
    %c1 = arith.constant 1 : index
    %1 = memref.load %arg1[%c1] : memref<7xf32, #tpu.memory_space<smem>>
    %c2 = arith.constant 2 : index
    %2 = memref.load %arg1[%c2] : memref<7xf32, #tpu.memory_space<smem>>
    %c3 = arith.constant 3 : index
    %3 = memref.load %arg1[%c3] : memref<7xf32, #tpu.memory_space<smem>>
    %c4 = arith.constant 4 : index
    %4 = memref.load %arg1[%c4] : memref<7xf32, #tpu.memory_space<smem>>
    %c5 = arith.constant 5 : index
    %5 = memref.load %arg1[%c5] : memref<7xf32, #tpu.memory_space<smem>>
    %c6 = arith.constant 6 : index
    %6 = memref.load %arg1[%c6] : memref<7xf32, #tpu.memory_space<smem>>
    %c0_i32 = arith.constant 0 : i32
    %7 = arith.cmpi eq, %arg0, %c0_i32 : i32
    %8 = arith.extui %7 : i1 to i32
    %c0_i32_0 = arith.constant 0 : i32
    %9 = arith.cmpi ne, %8, %c0_i32_0 : i32
    scf.if %9 {
      %c0_22 = arith.constant 0 : index
      %c0_23 = arith.constant 0 : index
      %54 = vector.load %arg5[%c0_22, %c0_23] : memref<8x128xf32, #tpu.memory_space<vmem>>, vector<8x128xf32>
      %c0_24 = arith.constant 0 : index
      %c0_25 = arith.constant 0 : index
      %55 = vector.load %arg8[%c0_24, %c0_25] : memref<8x128xf32, #tpu.memory_space<vmem>>, vector<8x128xf32>
      tpu.vector_store %arg8[%c0_24, %c0_25], %54 {strides = array<i32>} : memref<8x128xf32, #tpu.memory_space<vmem>>, vector<8x128xf32>,
    } else {
    }
    %c0_1 = arith.constant 0 : index
    %c0_2 = arith.constant 0 : index
    %c0_3 = arith.constant 0 : index
    %10 = vector.load %arg2[%c0_1, %c0_2, %c0_3] : memref<1x8x128xf32, #tpu.memory_space<vmem>>, vector<1x8x128xf32>
    %11 = vector.shape_cast %10 : vector<1x8x128xf32> to vector<8x128xf32>
    %c0_4 = arith.constant 0 : index
    %c0_5 = arith.constant 0 : index
    %12 = vector.load %arg3[%c0_4, %c0_5] : memref<128x128xf32, #tpu.memory_space<vmem>>, vector<128x128xf32>
    %cst = arith.constant dense<0.000000e+00> : vector<8x128xf32>
    %13 = tpu.matmul %11, %12, %cst {dimension_numbers = #tpu.dot_dimension_numbers<[1], [0], [0], [1], [0, 0, 1, 1], [], []>} : vector<8x128xf32>, vector<128x128xf32>, vector<8x128xf32> -> vector<8x128xf32>
    %14 = vector.broadcast %2 : f32 to vector<8x128xf32>
    %15 = arith.mulf %13, %14 : vector<8x128xf32>
    %16 = math.roundeven %15 : vector<8x128xf32>
    %cst_6 = arith.constant 0xCB000000 : f32
    %cst_7 = arith.constant 0x4AFFFFFE : f32
    %17 = vector.broadcast %cst_6 : f32 to vector<8x128xf32>
    %18 = arith.maximumf %17, %16 : vector<8x128xf32>
    %19 = vector.broadcast %cst_7 : f32 to vector<8x128xf32>
    %20 = arith.minimumf %19, %18 : vector<8x128xf32>
    %21 = vector.broadcast %3 : f32 to vector<8x128xf32>
    %22 = arith.mulf %20, %21 : vector<8x128xf32>
    %c0_8 = arith.constant 0 : index
    %c0_9 = arith.constant 0 : index
    %23 = vector.load %arg8[%c0_8, %c0_9] : memref<8x128xf32, #tpu.memory_space<vmem>>, vector<8x128xf32>
    %24 = vector.broadcast %0 : f32 to vector<8x128xf32>
    %25 = arith.mulf %24, %23 : vector<8x128xf32>
    %26 = arith.addf %25, %22 : vector<8x128xf32>
    %27 = vector.broadcast %1 : f32 to vector<8x128xf32>
    %28 = arith.cmpf ogt, %26, %27 : vector<8x128xf32>
    %cst_10 = arith.constant 0.000000e+00 : f32
    %29 = vector.broadcast %cst_10 : f32 to vector<8x128xf32>
    %30 = arith.select %28, %29, %26 : vector<8x128xi1>, vector<8x128xf32>
    %c0_11 = arith.constant 0 : index
    %c0_12 = arith.constant 0 : index
    %31 = vector.load %arg8[%c0_11, %c0_12] : memref<8x128xf32, #tpu.memory_space<vmem>>, vector<8x128xf32>
    tpu.vector_store %arg8[%c0_11, %c0_12], %30 {strides = array<i32>} : memref<8x128xf32, #tpu.memory_space<vmem>>, vector<8x128xf32>,
    %32 = arith.extui %28 : vector<8x128xi1> to vector<8x128xi32>
    %33 = arith.sitofp %32 : vector<8x128xi32> to vector<8x128xf32>
    %34 = arith.truncf %33 : vector<8x128xf32> to vector<8x128xbf16>
    %c0_13 = arith.constant 0 : index
    %c0_14 = arith.constant 0 : index
    %35 = vector.load %arg4[%c0_13, %c0_14] : memref<128x128xbf16, #tpu.memory_space<vmem>>, vector<128x128xbf16>
    %cst_15 = arith.constant dense<0.000000e+00> : vector<8x128xf32>
    %36 = tpu.matmul %34, %35, %cst_15 {dimension_numbers = #tpu.dot_dimension_numbers<[1], [0], [0], [1], [0, 0, 1, 1], [], []>} : vector<8x128xbf16>, vector<128x128xbf16>, vector<8x128xf32> -> vector<8x128xf32>
    %37 = vector.broadcast %6 : f32 to vector<8x128xf32>
    %38 = arith.mulf %36, %37 : vector<8x128xf32>
    %39 = vector.broadcast %4 : f32 to vector<8x128xf32>
    %40 = arith.mulf %38, %39 : vector<8x128xf32>
    %41 = math.roundeven %40 : vector<8x128xf32>
    %cst_16 = arith.constant 0xCB000000 : f32
    %cst_17 = arith.constant 0x4AFFFFFE : f32
    %42 = vector.broadcast %cst_16 : f32 to vector<8x128xf32>
    %43 = arith.maximumf %42, %41 : vector<8x128xf32>
    %44 = vector.broadcast %cst_17 : f32 to vector<8x128xf32>
    %45 = arith.minimumf %44, %43 : vector<8x128xf32>
    %46 = vector.broadcast %5 : f32 to vector<8x128xf32>
    %47 = arith.mulf %45, %46 : vector<8x128xf32>
    %c0_18 = arith.constant 0 : index
    %c0_19 = arith.constant 0 : index
    %c0_20 = arith.constant 0 : index
    %48 = vector.load %arg6[%c0_18, %c0_19, %c0_20] : memref<1x8x128xf32, #tpu.memory_space<vmem>>, vector<1x8x128xf32>
    %49 = vector.shape_cast %48 : vector<1x8x128xf32> to vector<8x128xf32>
    %50 = vector.shape_cast %47 : vector<8x128xf32> to vector<1x8x128xf32>
    tpu.vector_store %arg6[%c0_18, %c0_19, %c0_20], %50 {strides = array<i32>} : memref<1x8x128xf32, #tpu.memory_space<vmem>>, vector<1x8x128xf32>,
    %c7_i32 = arith.constant 7 : i32
    %51 = arith.cmpi eq, %arg0, %c7_i32 : i32
    %52 = arith.extui %51 : i1 to i32
    %c0_i32_21 = arith.constant 0 : i32
    %53 = arith.cmpi ne, %52, %c0_i32_21 : i32
    scf.if %53 {
      %c0_22 = arith.constant 0 : index
      %c0_23 = arith.constant 0 : index
      %54 = vector.load %arg8[%c0_22, %c0_23] : memref<8x128xf32, #tpu.memory_space<vmem>>, vector<8x128xf32>
      %c0_24 = arith.constant 0 : index
      %c0_25 = arith.constant 0 : index
      %55 = vector.load %arg7[%c0_24, %c0_25] : memref<8x128xf32, #tpu.memory_space<vmem>>, vector<8x128xf32>
      tpu.vector_store %arg7[%c0_24, %c0_25], %54 {strides = array<i32>} : memref<8x128xf32, #tpu.memory_space<vmem>>, vector<8x128xf32>,
    } else {
    }
    return
  }
  func.func @transform_0(%arg0: i32) -> i32 {
    %c0_i32 = arith.constant 0 : i32
    %c0_i32_0 = arith.constant 0 : i32
    return %c0_i32 : i32
  }
  func.func @transform_1(%arg0: i32) -> (i32, i32, i32) {
    %c0_i32 = arith.constant 0 : i32
    %c0_i32_0 = arith.constant 0 : i32
    %c0_i32_1 = arith.constant 0 : i32
    return %arg0, %c0_i32, %c0_i32_0 : i32, i32, i32
  }
  func.func @transform_2(%arg0: i32) -> (i32, i32) {
    %c0_i32 = arith.constant 0 : i32
    %c0_i32_0 = arith.constant 0 : i32
    %c0_i32_1 = arith.constant 0 : i32
    return %c0_i32, %c0_i32_0 : i32, i32
  }
  func.func @transform_3(%arg0: i32) -> (i32, i32) {
    %c0_i32 = arith.constant 0 : i32
    %c0_i32_0 = arith.constant 0 : i32
    %c0_i32_1 = arith.constant 0 : i32
    return %c0_i32, %c0_i32_0 : i32, i32
  }
  func.func @transform_4(%arg0: i32) -> (i32, i32) {
    %c0_i32 = arith.constant 0 : i32
    %c0_i32_0 = arith.constant 0 : i32
    %c0_i32_1 = arith.constant 0 : i32
    return %c0_i32, %c0_i32_0 : i32, i32
  }
  func.func @transform_5(%arg0: i32) -> (i32, i32, i32) {
    %c0_i32 = arith.constant 0 : i32
    %c0_i32_0 = arith.constant 0 : i32
    %c0_i32_1 = arith.constant 0 : i32
    return %arg0, %c0_i32, %c0_i32_0 : i32, i32, i32
  }
  func.func @transform_6(%arg0: i32) -> (i32, i32) {
    %c0_i32 = arith.constant 0 : i32
    %c0_i32_0 = arith.constant 0 : i32
    %c0_i32_1 = arith.constant 0 : i32
    return %c0_i32, %c0_i32_0 : i32, i32
  }
}

</mosaic_0001>

<llo_original>
// kernel: tpu_custom_call.1
$region0: #{tpu_custom_call.1}
  #allocation0 [shape = 'u32[]', space=smem, size = 0x4, offset = 0x4, fixed_abs, tag = 'smem constant byte address 0x4 - core index']
  #allocation1 [shape = 'u32[144,128]{1,0:T(1,128)}', space=vmem, size = 0x12000, scoped, tag = 'internal scratch']
  #allocation2 [shape = 'f32[8,128]{1,0:T(8,128)}', space=vmem, size = 0x1000, scoped, tag = 'scratch operand']
  %s0 = inlined_call_operand.vmem [shape: f32[7], index: 0, kind: input, shape index: {}]
  %s1 = inlined_call_operand.hbm [shape: f32[8,8,128], index: 1, kind: input, shape index: {}]
  %s2 = inlined_call_operand.hbm [shape: f32[128,128], index: 2, kind: input, shape index: {}]
  %s3 = inlined_call_operand.hbm [shape: bf16[128,128], index: 3, kind: input, shape index: {}]
  %s4 = inlined_call_operand.hbm [shape: f32[8,128], index: 4, kind: input, shape index: {}, may-alias: {4,6}]
  %s5 = inlined_call_operand.hbm [shape: f32[8,8,128], index: 5, kind: output, shape index: {0}]
  %s6 = inlined_call_operand.hbm [shape: f32[8,128], index: 6, kind: output, shape index: {1}, may-alias: {4,6}]
  %7 = xla_tuple %s5, %s6
  %s8 = sld [smem:[#allocation0]]
  $region89: #{tpu_custom_call.1} parent=0
    _
  %s10 = ssub.s32 1, %s8
  %s11 = scalar_select 0, %s10, %s8
  $region1: #{tpu_custom_call.1} parent=0
    #allocation3 [shape = 'u8[512]{0}', space=smem, size = 0x200, scoped, tag = 'input window, operand 0, single buffered']
    #allocation4 [shape = 's32[2]{0}', space=sflag, size = 0x8, scoped, tag = 'scoped memory for tpu_custom_call.1']
    #allocation5 [shape = 's32[2]{0}', space=sflag, size = 0x8, scoped, tag = 'scoped memory for tpu_custom_call.1']
    #allocation6 [shape = 's32[2]{0}', space=sflag, size = 0x8, scoped, tag = 'scoped memory for tpu_custom_call.1']
    #allocation7 [shape = 'u8[8192]{0}', space=vmem, size = 0x2000, scoped, tag = 'input window, operand 1']
    #allocation8 [shape = 'u8[65536]{0}', space=vmem, size = 0x10000, scoped, tag = 'input window, operand 2, single buffered']
    #allocation9 [shape = 's32[1]{0}', space=sflag, size = 0x4, scoped, tag = 'scoped memory for tpu_custom_call.1']
    #allocation10 [shape = 'u8[32768]{0}', space=vmem, size = 0x8000, scoped, tag = 'input window, operand 3, single buffered']
    #allocation11 [shape = 'u8[4096]{0}', space=vmem, size = 0x1000, scoped, tag = 'input window, operand 4, single buffered']
    #allocation12 [shape = 's32[1]{0}', space=sflag, size = 0x4, scoped, tag = 'scoped memory for tpu_custom_call.1']
    #allocation13 [shape = 'u8[8192]{0}', space=vmem, size = 0x2000, scoped, tag = 'output window, operand 0']
    #allocation14 [shape = 'u8[4096]{0}', space=vmem, size = 0x1000, scoped, tag = 'output window, operand 1, single buffered']
    #allocation15 [shape = 's32[1]{0}', space=sflag, size = 0x4, scoped, tag = 'scoped memory for tpu_custom_call.1']
    %12 = vsyncpa [#allocation6], 0
    %13 = vsyncpa [#allocation4], 0
    %s14 = scalar_lea.sflag [#allocation4], 1
    %15 = vsyncpa %s14, 0
    %16 = vsyncpa [#allocation9], 0
    %17 = vsyncpa [#allocation12], 0
    %18 = vsyncpa [#allocation5], 0
    %s19 = scalar_lea.sflag [#allocation5], 1
    %20 = vsyncpa %s19, 0
    %21 = vsyncpa [#allocation15], 0
    loop: start=0, step=1, limit=10
    $region2: #{tpu_custom_call.1} parent=1 // loop_pre_header
      _
    $region3: #{tpu_custom_call.1} parent=1 // loop_header
      %s23 = sphi 0, %s27
      %p24 = scmp.ge.s32.totalorder %s23, 10
      %s31 = sphi 0, %s31
      %s33 = sphi 0, %s31
      %s34 = sphi 0, %s33
      %s48 = sphi 0, %s34
      %s54 = sphi 0, %s56
      %s57 = sphi 0, %s54
      %s58 = sphi 0, %s57
      %s74 = sphi 0, %s58
      %s78 = sphi 0, %s78
      %s80 = sphi 0, %s78
      %s81 = sphi 0, %s80
      %s95 = sphi 0, %s81
      %s99 = sphi 0, %s99
      %s101 = sphi 0, %s99
      %s102 = sphi 0, %s101
      %s116 = sphi 0, %s102
      %s120 = sphi 0, %s120
      %s122 = sphi 0, %s120
      %s123 = sphi 0, %s122
      %s137 = sphi 0, %s123
      %s143 = sphi 0, %s145
      %s146 = sphi 0, %s143
      %s147 = sphi 0, %s146
      %s163 = sphi 0, %s147
      %s167 = sphi 0, %s167
      %s169 = sphi 0, %s167
      %s170 = sphi 0, %s169
      %s184 = sphi 0, %s170
    $region4: #{tpu_custom_call.1} parent=1 // loop_header_branch
      %26 = sbr.rel (%p24) target = $region8
    $region5: #{tpu_custom_call.1} parent=1 // loop_body
      %s28 = ssub.s32 %s23, 1
      %s29 = ssub.s32 %s23, 2
      %s30 = sadd.s32 %s23, 1
      %s32 = sadd.s32 %s31, 1
      %p35 = scmp.eq.s32.totalorder %s23, 7
      %p36 = scmp.ne.s32.totalorder %s31, %s33
      %p37 = scmp.eq.s32.totalorder %s23, 0
      %p38 = por %p36, %p37
      %p39 = scmp.ne.s32.totalorder %s31, %s33
      %p40 = scmp.eq.s32.totalorder %s28, 7
      %p41 = por %p39, %p40
      %p42 = scmp.ne.s32.totalorder %s33, %s34
      %p43 = scmp.eq.s32.totalorder %s28, 0
      %p44 = por %p42, %p43
      %p45 = scmp.ne.s32.totalorder %s33, %s34
      %p46 = scmp.eq.s32.totalorder %s29, 7
      %p47 = por %p45, %p46
      %p49 = scmp.ne.s32.totalorder %s34, %s48
      %p50 = scmp.eq.s32.totalorder %s29, 0
      %p51 = por %p49, %p50
      %s52 = ssub.s32 %s23, %s30
      %p53 = scmp.eq.s32.totalorder %s52, 0
      %s55 = sadd.s32 %s54, 1
      %s56 = scalar_select %p53, %s54, %s55
      %p59 = pneg %p53
      %p60 = scmp.eq.s32.totalorder %s23, 7
      %p61 = por %p59, %p60
      %p62 = scmp.ne.s32.totalorder %s54, %s57
      %p63 = scmp.eq.s32.totalorder %s23, 0
      %p64 = por %p62, %p63
      %p65 = scmp.ne.s32.totalorder %s54, %s57
      %p66 = scmp.eq.s32.totalorder %s28, 7
      %p67 = por %p65, %p66
      %p68 = scmp.ne.s32.totalorder %s57, %s58
      %p69 = scmp.eq.s32.totalorder %s28, 0
      %p70 = por %p68, %p69
      %p71 = scmp.ne.s32.totalorder %s57, %s58
      %p72 = scmp.eq.s32.totalorder %s29, 7
      %p73 = por %p71, %p72
      %p75 = scmp.ne.s32.totalorder %s58, %s74
      %p76 = scmp.eq.s32.totalorder %s29, 0
      %p77 = por %p75, %p76
      %s79 = sadd.s32 %s78, 1
      %p82 = scmp.eq.s32.totalorder %s23, 7
      %p83 = scmp.ne.s32.totalorder %s78, %s80
      %p84 = scmp.eq.s32.totalorder %s23, 0
      %p85 = por %p83, %p84
      %p86 = scmp.ne.s32.totalorder %s78, %s80
      %p87 = scmp.eq.s32.totalorder %s28, 7
      %p88 = por %p86, %p87
      %p89 = scmp.ne.s32.totalorder %s80, %s81
      %p90 = scmp.eq.s32.totalorder %s28, 0
      %p91 = por %p89, %p90
      %p92 = scmp.ne.s32.totalorder %s80, %s81
      %p93 = scmp.eq.s32.totalorder %s29, 7
      %p94 = por %p92, %p93
      %p96 = scmp.ne.s32.totalorder %s81, %s95
      %p97 = scmp.eq.s32.totalorder %s29, 0
      %p98 = por %p96, %p97
      %s100 = sadd.s32 %s99, 1
      %p103 = scmp.eq.s32.totalorder %s23, 7
      %p104 = scmp.ne.s32.totalorder %s99, %s101
      %p105 = scmp.eq.s32.totalorder %s23, 0
      %p106 = por %p104, %p105
      %p107 = scmp.ne.s32.totalorder %s99, %s101
      %p108 = scmp.eq.s32.totalorder %s28, 7
      %p109 = por %p107, %p108
      %p110 = scmp.ne.s32.totalorder %s101, %s102
      %p111 = scmp.eq.s32.totalorder %s28, 0
      %p112 = por %p110, %p111
      %p113 = scmp.ne.s32.totalorder %s101, %s102
      %p114 = scmp.eq.s32.totalorder %s29, 7
      %p115 = por %p113, %p114
      %p117 = scmp.ne.s32.totalorder %s102, %s116
      %p118 = scmp.eq.s32.totalorder %s29, 0
      %p119 = por %p117, %p118
      %s121 = sadd.s32 %s120, 1
      %p124 = scmp.eq.s32.totalorder %s23, 7
      %p125 = scmp.ne.s32.totalorder %s120, %s122
      %p126 = scmp.eq.s32.totalorder %s23, 0
      %p127 = por %p125, %p126
      %p128 = scmp.ne.s32.totalorder %s120, %s122
      %p129 = scmp.eq.s32.totalorder %s28, 7
      %p130 = por %p128, %p129
      %p131 = scmp.ne.s32.totalorder %s122, %s123
      %p132 = scmp.eq.s32.totalorder %s28, 0
      %p133 = por %p131, %p132
      %p134 = scmp.ne.s32.totalorder %s122, %s123
      %p135 = scmp.eq.s32.totalorder %s29, 7
      %p136 = por %p134, %p135
      %p138 = scmp.ne.s32.totalorder %s123, %s137
      %p139 = scmp.eq.s32.totalorder %s29, 0
      %p140 = por %p138, %p139
      %s141 = ssub.s32 %s23, %s30
      %p142 = scmp.eq.s32.totalorder %s141, 0
      %s144 = sadd.s32 %s143, 1
      %s145 = scalar_select %p142, %s143, %s144
      %p148 = pneg %p142
      %p149 = scmp.eq.s32.totalorder %s23, 7
      %p150 = por %p148, %p149
      %p151 = scmp.ne.s32.totalorder %s143, %s146
      %p152 = scmp.eq.s32.totalorder %s23, 0
      %p153 = por %p151, %p152
      %p154 = scmp.ne.s32.totalorder %s143, %s146
      %p155 = scmp.eq.s32.totalorder %s28, 7
      %p156 = por %p154, %p155
      %p157 = scmp.ne.s32.totalorder %s146, %s147
      %p158 = scmp.eq.s32.totalorder %s28, 0
      %p159 = por %p157, %p158
      %p160 = scmp.ne.s32.totalorder %s146, %s147
      %p161 = scmp.eq.s32.totalorder %s29, 7
      %p162 = por %p160, %p161
      %p164 = scmp.ne.s32.totalorder %s147, %s163
      %p165 = scmp.eq.s32.totalorder %s29, 0
      %p166 = por %p164, %p165
      %s168 = sadd.s32 %s167, 1
      %p171 = scmp.eq.s32.totalorder %s23, 7
      %p172 = scmp.ne.s32.totalorder %s167, %s169
      %p173 = scmp.eq.s32.totalorder %s23, 0
      %p174 = por %p172, %p173
      %p175 = scmp.ne.s32.totalorder %s167, %s169
      %p176 = scmp.eq.s32.totalorder %s28, 7
      %p177 = por %p175, %p176
      %p178 = scmp.ne.s32.totalorder %s169, %s170
      %p179 = scmp.eq.s32.totalorder %s28, 0
      %p180 = por %p178, %p179
      %p181 = scmp.ne.s32.totalorder %s169, %s170
      %p182 = scmp.eq.s32.totalorder %s29, 7
      %p183 = por %p181, %p182
      %p185 = scmp.ne.s32.totalorder %s170, %s184
      %p186 = scmp.eq.s32.totalorder %s29, 0
      %p187 = por %p185, %p186
      %p188 = scmp.le.s32.totalorder 1, %s23
      %p189 = scmp.lt.s32.totalorder %s23, 9
      %p190 = pnand %p188, %p189
      %p191 = pneg %p190
      // Predicated region
      $region9: #{tpu_custom_call.1} parent=5 // pred_check
        _
      $region10: #{tpu_custom_call.1} parent=5 // pred_check_branch
        %193 = sbr.rel (%p190) target = $region12
      $region11: #{tpu_custom_call.1} parent=5 // pred_region
        %s194 = ssub.s32 %s23, 1
        // Predicated region
        $region13: #{tpu_custom_call.1} parent=11 // pred_check
          %p195 = pneg %p44
        $region14: #{tpu_custom_call.1} parent=11 // pred_check_branch
          %197 = sbr.rel (%p195) target = $region16
        $region15: #{tpu_custom_call.1} parent=11 // pred_region
          %s199 = ssub.s32 16, 16
          %200 = vsyncadd [#allocation6], %s199
          %s202 = sshll.u32 %s0, 4
          %s203 = int_to_ptr.vmem [resolvable:$true] %s202
          %205 = dma.vmem_to_smem %s203, 16, [#allocation3], [#allocation6]
        $region16: #{tpu_custom_call.1} parent=11 // pred_fallthru
          _
        // Predicated region
        $region17: #{tpu_custom_call.1} parent=11 // pred_check
          %p206 = pneg %p91
        $region18: #{tpu_custom_call.1} parent=11 // pred_check_branch
          %208 = sbr.rel (%p206) target = $region20
        $region19: #{tpu_custom_call.1} parent=11 // pred_region
          %s210 = ssub.s32 2048, 2048
          %211 = vsyncadd [#allocation9], %s210
          %s212 = sshll.u32 [#allocation8], 4
          %s213 = int_to_ptr.vmem [resolvable:$true] %s212
          %218 = dma.hbm_to_vmem [thread:$0]  %s2, 2048, %s213, [#allocation9], 128, 128, 8
        $region20: #{tpu_custom_call.1} parent=11 // pred_fallthru
          _
        // Predicated region
        $region21: #{tpu_custom_call.1} parent=11 // pred_check
          %p219 = pneg %p112
        $region22: #{tpu_custom_call.1} parent=11 // pred_check_branch
          %221 = sbr.rel (%p219) target = $region24
        $region23: #{tpu_custom_call.1} parent=11 // pred_region
          %s223 = ssub.s32 1024, 1024
          %224 = vsyncadd [#allocation9], %s223
          %s225 = sshll.u32 [#allocation10], 4
          %s226 = int_to_ptr.vmem [resolvable:$true] %s225
          %231 = dma.hbm_to_vmem [thread:$0]  %s3, 1024, %s226, [#allocation9], 64, 64, 4
        $region24: #{tpu_custom_call.1} parent=11 // pred_fallthru
          _
        // Predicated region
        $region25: #{tpu_custom_call.1} parent=11 // pred_check
          %p232 = pneg %p133
        $region26: #{tpu_custom_call.1} parent=11 // pred_check_branch
          %234 = sbr.rel (%p232) target = $region28
        $region27: #{tpu_custom_call.1} parent=11 // pred_region
          %s236 = ssub.s32 128, 128
          %237 = vsyncadd [#allocation12], %s236
          %s239 = sshll.u32 [#allocation11], 4
          %s240 = int_to_ptr.vmem [resolvable:$true] %s239
          %242 = dma.hbm_to_vmem [thread:$0]  %s4, 128, %s240, [#allocation12]
        $region28: #{tpu_custom_call.1} parent=11 // pred_fallthru
          _
      $region12: #{tpu_custom_call.1} parent=5 // pred_fallthru
        _
      %p243 = scmp.lt.s32.totalorder %s23, 8
      // Predicated region
      $region29: #{tpu_custom_call.1} parent=5 // pred_check
        %p244 = pneg %p243
      $region30: #{tpu_custom_call.1} parent=5 // pred_check_branch
        %246 = sbr.rel (%p244) target = $region32
      $region31: #{tpu_custom_call.1} parent=5 // pred_region
        // Predicated region
        $region33: #{tpu_custom_call.1} parent=31 // pred_check
          %p247 = pneg %p64
        $region34: #{tpu_custom_call.1} parent=31 // pred_check_branch
          %249 = sbr.rel (%p247) target = $region36
        $region35: #{tpu_custom_call.1} parent=31 // pred_region
          %s250 = sand.u32 %s54, 1
          %s251 = scalar_lea.sflag [#allocation4], %s250
          %s252 = sand.u32 %s54, 1
          %s253 = smul.addr %s252, 8
          %s254 = scalar_lea.vmem [#allocation7], %s253
          %s256 = ssub.s32 128, 128
          %257 = vsyncadd %s251, %s256
          %s258 = smul.addr %s23, 128
          %s259 = scalar_lea.hbm %s1, %s258
          %s261 = sshll.u32 %s254, 4
          %s262 = int_to_ptr.vmem [resolvable:$true] %s261
          %264 = dma.hbm_to_vmem [thread:$0]  %s259, 128, %s262, %s251
        $region36: #{tpu_custom_call.1} parent=31 // pred_fallthru
          _
      $region32: #{tpu_custom_call.1} parent=5 // pred_fallthru
        _
      %p265 = scmp.le.s32.totalorder 1, %s23
      %p266 = scmp.lt.s32.totalorder %s23, 9
      %p267 = pnand %p265, %p266
      %p268 = pneg %p267
      // Predicated region
      $region37: #{tpu_custom_call.1} parent=5 // pred_check
        _
      $region38: #{tpu_custom_call.1} parent=5 // pred_check_branch
        %270 = sbr.rel (%p267) target = $region40
      $region39: #{tpu_custom_call.1} parent=5 // pred_region
        %s271 = ssub.s32 %s23, 1
        // Predicated region
        $region41: #{tpu_custom_call.1} parent=39 // pred_check
          %p272 = pneg %p44
        $region42: #{tpu_custom_call.1} parent=39 // pred_check_branch
          %274 = sbr.rel (%p272) target = $region44
        $region43: #{tpu_custom_call.1} parent=39 // pred_region
          %275 = dma.done [#allocation6], 16
        $region44: #{tpu_custom_call.1} parent=39 // pred_fallthru
          _
        %s276 = sand.u32 %s57, 1
        %s277 = scalar_lea.sflag [#allocation4], %s276
        %s278 = sand.u32 %s57, 1
        %s279 = smul.addr %s278, 8
        %s280 = scalar_lea.vmem [#allocation7], %s279
        // Predicated region
        $region45: #{tpu_custom_call.1} parent=39 // pred_check
          %p281 = pneg %p70
        $region46: #{tpu_custom_call.1} parent=39 // pred_check_branch
          %283 = sbr.rel (%p281) target = $region48
        $region47: #{tpu_custom_call.1} parent=39 // pred_region
          %284 = dma.done %s277, 128
        $region48: #{tpu_custom_call.1} parent=39 // pred_fallthru
          _
        // Predicated region
        $region49: #{tpu_custom_call.1} parent=39 // pred_check
          %p285 = pneg %p91
        $region50: #{tpu_custom_call.1} parent=39 // pred_check_branch
          %287 = sbr.rel (%p285) target = $region52
        $region51: #{tpu_custom_call.1} parent=39 // pred_region
          %288 = dma.done [#allocation9], 2048
        $region52: #{tpu_custom_call.1} parent=39 // pred_fallthru
          _
        // Predicated region
        $region53: #{tpu_custom_call.1} parent=39 // pred_check
          %p289 = pneg %p112
        $region54: #{tpu_custom_call.1} parent=39 // pred_check_branch
          %291 = sbr.rel (%p289) target = $region56
        $region55: #{tpu_custom_call.1} parent=39 // pred_region
          %292 = dma.done [#allocation9], 1024
        $region56: #{tpu_custom_call.1} parent=39 // pred_fallthru
          _
        // Predicated region
        $region57: #{tpu_custom_call.1} parent=39 // pred_check
          %p293 = pneg %p133
        $region58: #{tpu_custom_call.1} parent=39 // pred_check_branch
          %295 = sbr.rel (%p293) target = $region60
        $region59: #{tpu_custom_call.1} parent=39 // pred_region
          %296 = dma.done [#allocation12], 128
        $region60: #{tpu_custom_call.1} parent=39 // pred_fallthru
          _
        %297 = sfence
        %p298 = pneg %p44
        %p299 = pneg %p41
        %s300 = sand.u32 %s57, 1
        %s301 = scalar_lea.sflag [#allocation4], %s300
        %s302 = sand.u32 %s57, 1
        %s303 = smul.addr %s302, 8
        %s304 = scalar_lea.vmem [#allocation7], %s303
        %p305 = pneg %p70
        %p306 = pneg %p67
        %p307 = pneg %p91
        %p308 = pneg %p88
        %p309 = pneg %p112
        %p310 = pneg %p109
        %p311 = pneg %p133
        %p312 = pneg %p130
        %p313 = pneg %p159
        %p314 = pneg %p156
        %s315 = sand.u32 %s146, 1
        %s316 = scalar_lea.sflag [#allocation5], %s315
        %s317 = sand.u32 %s146, 1
        %s318 = smul.addr %s317, 8
        %s319 = scalar_lea.vmem [#allocation13], %s318
        %p320 = pneg %p180
        %p321 = pneg %p177
        %s323 = sld [smem:[#allocation3]]
        %s324 = sld [smem:[#allocation3 + $0x1]]
        %s325 = sld [smem:[#allocation3 + $0x2]]
        %s326 = sld [smem:[#allocation3 + $0x3]]
        %s327 = sld [smem:[#allocation3 + $0x4]]
        %s328 = sld [smem:[#allocation3 + $0x5]]
        %s329 = sld [smem:[#allocation3 + $0x6]]
        %p330 = scmp.eq.s32.totalorder %s28, 0
        // Predicated region
        $region61: #{tpu_custom_call.1} parent=39 // pred_check
          %p331 = pneg %p330
        $region62: #{tpu_custom_call.1} parent=39 // pred_check_branch
          %333 = sbr.rel (%p331) target = $region64
        $region63: #{tpu_custom_call.1} parent=39 // pred_region
          %v334 = vld [vmem:[#allocation11] sm:$0xff]
          %335 = vst [vmem:[#allocation2] sm:$0xff] %v334
        $region64: #{tpu_custom_call.1} parent=39 // pred_fallthru
          _
        %v336 = vld [vmem:[%s280] sm:$0xff]
        %v337 = vld [vmem:[#allocation8] sm:$0xff]
        %v338 = vld [vmem:[#allocation8 + $0x8] sm:$0xff]
        %v339 = vld [vmem:[#allocation8 + $0x10] sm:$0xff]
        %v340 = vld [vmem:[#allocation8 + $0x18] sm:$0xff]
        %v341 = vld [vmem:[#allocation8 + $0x20] sm:$0xff]
        %v342 = vld [vmem:[#allocation8 + $0x28] sm:$0xff]
        %v343 = vld [vmem:[#allocation8 + $0x30] sm:$0xff]
        %v344 = vld [vmem:[#allocation8 + $0x38] sm:$0xff]
        %v345 = vld [vmem:[#allocation8 + $0x40] sm:$0xff]
        %v346 = vld [vmem:[#allocation8 + $0x48] sm:$0xff]
        %v347 = vld [vmem:[#allocation8 + $0x50] sm:$0xff]
        %v348 = vld [vmem:[#allocation8 + $0x58] sm:$0xff]
        %v349 = vld [vmem:[#allocation8 + $0x60] sm:$0xff]
        %v350 = vld [vmem:[#allocation8 + $0x68] sm:$0xff]
        %v351 = vld [vmem:[#allocation8 + $0x70] sm:$0xff]
        %v352 = vld [vmem:[#allocation8 + $0x78] sm:$0xff]
        %353 = vmatprep.subr.mxu0 0.0
        %354 = vmatpush1.msra.mxu0 %v352
        %355 = vmatprep.subr.mxu0 0.0
        %356 = vmatpush1.msra.mxu0 %v351
        %357 = vmatprep.subr.mxu0 0.0
        %358 = vmatpush1.msra.mxu0 %v350
        %359 = vmatprep.subr.mxu0 0.0
        %360 = vmatpush1.msra.mxu0 %v349
        %361 = vmatprep.subr.mxu0 0.0
        %362 = vmatpush1.msra.mxu0 %v348
        %363 = vmatprep.subr.mxu0 0.0
        %364 = vmatpush1.msra.mxu0 %v347
        %365 = vmatprep.subr.mxu0 0.0
        %366 = vmatpush1.msra.mxu0 %v346
        %367 = vmatprep.subr.mxu0 0.0
        %368 = vmatpush1.msra.mxu0 %v345
        %369 = vmatprep.subr.mxu0 0.0
        %370 = vmatpush1.msra.mxu0 %v344
        %371 = vmatprep.subr.mxu0 0.0
        %372 = vmatpush1.msra.mxu0 %v343
        %373 = vmatprep.subr.mxu0 0.0
        %374 = vmatpush1.msra.mxu0 %v342
        %375 = vmatprep.subr.mxu0 0.0
        %376 = vmatpush1.msra.mxu0 %v341
        %377 = vmatprep.subr.mxu0 0.0
        %378 = vmatpush1.msra.mxu0 %v340
        %379 = vmatprep.subr.mxu0 0.0
        %380 = vmatpush1.msra.mxu0 %v339
        %381 = vmatprep.subr.mxu0 0.0
        %382 = vmatpush1.msra.mxu0 %v338
        %383 = vmatprep.subr.mxu0 0.0
        %384 = vmatpush1.msra.mxu0 %v337
        %385 = vmatprep.subr.mxu0 0.0
        %386 = vmatpush2.msra.mxu0 0.0
        %387 = vmatprep.subr.mxu0 0.0
        %388 = vmatpush2.msra.mxu0 0.0
        %389 = vmatprep.subr.mxu0 0.0
        %390 = vmatpush2.msra.mxu0 0.0
        %391 = vmatprep.subr.mxu0 0.0
        %392 = vmatpush2.msra.mxu0 0.0
        %393 = vmatprep.subr.mxu0 0.0
        %394 = vmatpush2.msra.mxu0 0.0
        %395 = vmatprep.subr.mxu0 0.0
        %396 = vmatpush2.msra.mxu0 0.0
        %397 = vmatprep.subr.mxu0 0.0
        %398 = vmatpush2.msra.mxu0 0.0
        %399 = vmatprep.subr.mxu0 0.0
        %400 = vmatpush2.msra.mxu0 0.0
        %401 = vmatprep.subr.mxu0 0.0
        %402 = vmatpush2.msra.mxu0 0.0
        %403 = vmatprep.subr.mxu0 0.0
        %404 = vmatpush2.msra.mxu0 0.0
        %405 = vmatprep.subr.mxu0 0.0
        %406 = vmatpush2.msra.mxu0 0.0
        %407 = vmatprep.subr.mxu0 0.0
        %408 = vmatpush2.msra.mxu0 0.0
        %409 = vmatprep.subr.mxu0 0.0
        %410 = vmatpush2.msra.mxu0 0.0
        %411 = vmatprep.subr.mxu0 0.0
        %412 = vmatpush2.msra.mxu0 0.0
        %413 = vmatprep.subr.mxu0 0.0
        %414 = vmatpush2.msra.mxu0 0.0
        %415 = vmatprep.subr.mxu0 0.0
        %416 = vmatpush2.msra.mxu0 0.0
        %417 = vmatprep.mubr.f32.mxu0 0.0
        %418 = vmatmul.mubr.f32.gmra.mxu0 %v336
        %v419 = vpop.f32.mrf.mxu0
        %v420 = vadd.f32 0.0, %v419
        %v421 = vpop.f32.mrf.mxu0
        %422 = vdwg.mxu0
        %v423 = vstv %s325
        %v424 = vmul.f32 %v420, %v423
        %v425 = vround.ne.pseudo %v424
        %v426 = vmax.f32 %v425, -8388608.0
        %v427 = vmin.f32 %v426, 8388607.0
        %v428 = vstv %s326
        %v429 = vmul.f32 %v427, %v428
        %v430 = vld [vmem:[#allocation2] sm:$0xff]
        %v431 = vstv %s323
        %v432 = vmul.f32 %v431, %v430
        %v433 = vadd.f32 %v432, %v429
        %v434 = vstv %s324
        %vm435 = vcmp.gt.f32.partialorder %v433, %v434
        %v436 = vsel %vm435, 0.0, %v433
        %437 = vst [vmem:[#allocation2] sm:$0xff] %v436
        %v438 = vsel %vm435, 1, 0
        %v439 = vcvt.s32.f32 %v438
        %v440 = vpack.c.bf16 %v439, %v439
        %v441 = vld [vmem:[#allocation10] sm:$0xf]
        %v442 = vld [vmem:[#allocation10 + $0x4] sm:$0xf]
        %v443 = vld [vmem:[#allocation10 + $0x8] sm:$0xf]
        %v444 = vld [vmem:[#allocation10 + $0xc] sm:$0xf]
        %v445 = vld [vmem:[#allocation10 + $0x10] sm:$0xf]
        %v446 = vld [vmem:[#allocation10 + $0x14] sm:$0xf]
        %v447 = vld [vmem:[#allocation10 + $0x18] sm:$0xf]
        %v448 = vld [vmem:[#allocation10 + $0x1c] sm:$0xf]
        %v449 = vld [vmem:[#allocation10 + $0x20] sm:$0xf]
        %v450 = vld [vmem:[#allocation10 + $0x24] sm:$0xf]
        %v451 = vld [vmem:[#allocation10 + $0x28] sm:$0xf]
        %v452 = vld [vmem:[#allocation10 + $0x2c] sm:$0xf]
        %v453 = vld [vmem:[#allocation10 + $0x30] sm:$0xf]
        %v454 = vld [vmem:[#allocation10 + $0x34] sm:$0xf]
        %v455 = vld [vmem:[#allocation10 + $0x38] sm:$0xf]
        %v456 = vld [vmem:[#allocation10 + $0x3c] sm:$0xf]
        %v473 = vunpack.c.l.b16 %v441
        %v474 = vunpack.c.l.b16 %v442
        %v475 = vunpack.c.l.b16 %v443
        %v476 = vunpack.c.l.b16 %v444
        %v477 = vunpack.c.l.b16 %v445
        %v478 = vunpack.c.l.b16 %v446
        %v479 = vunpack.c.l.b16 %v447
        %v480 = vunpack.c.l.b16 %v448
        %v481 = vunpack.c.l.b16 %v449
        %v482 = vunpack.c.l.b16 %v450
        %v483 = vunpack.c.l.b16 %v451
        %v484 = vunpack.c.l.b16 %v452
        %v485 = vunpack.c.l.b16 %v453
        %v486 = vunpack.c.l.b16 %v454
        %v487 = vunpack.c.l.b16 %v455
        %v488 = vunpack.c.l.b16 %v456
        %v489 = vpack.c.b16 %v474, %v473
        %v490 = vpack.c.b16 %v476, %v475
        %v491 = vpack.c.b16 %v478, %v477
        %v492 = vpack.c.b16 %v480, %v479
        %v493 = vpack.c.b16 %v482, %v481
        %v494 = vpack.c.b16 %v484, %v483
        %v495 = vpack.c.b16 %v486, %v485
        %v496 = vpack.c.b16 %v488, %v487
        %505 = vmatprep.subr.bf16.mxu0 0
        %506 = vmatpush1.bf16.msra.mxu0 %v496
        %507 = vmatprep.subr.bf16.mxu0 0
        %508 = vmatpush1.bf16.msra.mxu0 %v495
        %509 = vmatprep.subr.bf16.mxu0 0
        %510 = vmatpush1.bf16.msra.mxu0 %v494
        %511 = vmatprep.subr.bf16.mxu0 0
        %512 = vmatpush1.bf16.msra.mxu0 %v493
        %513 = vmatprep.subr.bf16.mxu0 0
        %514 = vmatpush1.bf16.msra.mxu0 %v492
        %515 = vmatprep.subr.bf16.mxu0 0
        %516 = vmatpush1.bf16.msra.mxu0 %v491
        %517 = vmatprep.subr.bf16.mxu0 0
        %518 = vmatpush1.bf16.msra.mxu0 %v490
        %519 = vmatprep.subr.bf16.mxu0 0
        %520 = vmatpush1.bf16.msra.mxu0 %v489
        %521 = vmatprep.subr.bf16.mxu0 0
        %522 = vmatpush2.bf16.msra.mxu0 0
        %523 = vmatprep.subr.bf16.mxu0 0
        %524 = vmatpush2.bf16.msra.mxu0 0
        %525 = vmatprep.subr.bf16.mxu0 0
        %526 = vmatpush2.bf16.msra.mxu0 0
        %527 = vmatprep.subr.bf16.mxu0 0
        %528 = vmatpush2.bf16.msra.mxu0 0
        %529 = vmatprep.subr.bf16.mxu0 0
        %530 = vmatpush2.bf16.msra.mxu0 0
        %531 = vmatprep.subr.bf16.mxu0 0
        %532 = vmatpush2.bf16.msra.mxu0 0
        %533 = vmatprep.subr.bf16.mxu0 0
        %534 = vmatpush2.bf16.msra.mxu0 0
        %535 = vmatprep.subr.bf16.mxu0 0
        %536 = vmatpush2.bf16.msra.mxu0 0
        %537 = vmatprep.mubr.bf16.mxu0 0
        %538 = vmatmul.mubr.bf16.gmra.mxu0 %v440
        %v539 = vpop.f32.mrf.mxu0
        %v540 = vadd.f32 0.0, %v539
        %v541 = vpop.f32.mrf.mxu0
        %v542 = vpop.f32.mrf.mxu0
        %v543 = vpop.f32.mrf.mxu0
        %544 = vdwg.mxu0
        %v545 = vstv %s329
        %v546 = vmul.f32 %v540, %v545
        %v547 = vstv %s327
        %v548 = vmul.f32 %v546, %v547
        %v549 = vround.ne.pseudo %v548
        %v550 = vmax.f32 %v549, -8388608.0
        %v551 = vmin.f32 %v550, 8388607.0
        %v552 = vstv %s328
        %v553 = vmul.f32 %v551, %v552
        %554 = vst [vmem:[%s319] sm:$0xff] %v553
        %p555 = scmp.eq.s32.totalorder %s28, 7
        // Predicated region
        $region65: #{tpu_custom_call.1} parent=39 // pred_check
          %p556 = pneg %p555
        $region66: #{tpu_custom_call.1} parent=39 // pred_check_branch
          %558 = sbr.rel (%p556) target = $region68
        $region67: #{tpu_custom_call.1} parent=39 // pred_region
          %v559 = vld [vmem:[#allocation2] sm:$0xff]
          %560 = vst [vmem:[#allocation14] sm:$0xff] %v559
        $region68: #{tpu_custom_call.1} parent=39 // pred_fallthru
          _
        %s561 = sand.u32 %s146, 1
        %s562 = scalar_lea.sflag [#allocation5], %s561
        %s563 = sand.u32 %s146, 1
        %s564 = smul.addr %s563, 8
        %s565 = scalar_lea.vmem [#allocation13], %s564
        // Predicated region
        $region69: #{tpu_custom_call.1} parent=39 // pred_check
          %p566 = pneg %p156
        $region70: #{tpu_custom_call.1} parent=39 // pred_check_branch
          %568 = sbr.rel (%p566) target = $region72
        $region71: #{tpu_custom_call.1} parent=39 // pred_region
          %s570 = ssub.s32 128, 128
          %571 = vsyncadd %s562, %s570
          %s572 = smul.addr %s28, 128
          %s573 = scalar_lea.hbm %s5, %s572
          %s575 = sshll.u32 %s565, 4
          %s576 = int_to_ptr.vmem [resolvable:$true] %s575
          %578 = dma.vmem_to_hbm [thread:$0]  %s576, 128, %s573, %s562
        $region72: #{tpu_custom_call.1} parent=39 // pred_fallthru
          _
        // Predicated region
        $region73: #{tpu_custom_call.1} parent=39 // pred_check
          %p579 = pneg %p177
        $region74: #{tpu_custom_call.1} parent=39 // pred_check_branch
          %581 = sbr.rel (%p579) target = $region76
        $region75: #{tpu_custom_call.1} parent=39 // pred_region
          %s583 = ssub.s32 128, 128
          %584 = vsyncadd [#allocation15], %s583
          %s586 = sshll.u32 [#allocation14], 4
          %s587 = int_to_ptr.vmem [resolvable:$true] %s586
          %589 = dma.vmem_to_hbm [thread:$0]  %s587, 128, %s6, [#allocation15]
        $region76: #{tpu_custom_call.1} parent=39 // pred_fallthru
          _
        // Predicated region
        $region77: #{tpu_custom_call.1} parent=39 // pred_check
          %p590 = pneg %p177
        $region78: #{tpu_custom_call.1} parent=39 // pred_check_branch
          %592 = sbr.rel (%p590) target = $region80
        $region79: #{tpu_custom_call.1} parent=39 // pred_region
          %593 = dma.done [#allocation15], 128
        $region80: #{tpu_custom_call.1} parent=39 // pred_fallthru
          _
      $region40: #{tpu_custom_call.1} parent=5 // pred_fallthru
        _
      %p594 = scmp.le.s32.totalorder 2, %s23
      // Predicated region
      $region81: #{tpu_custom_call.1} parent=5 // pred_check
        %p595 = pneg %p594
      $region82: #{tpu_custom_call.1} parent=5 // pred_check_branch
        %597 = sbr.rel (%p595) target = $region84
      $region83: #{tpu_custom_call.1} parent=5 // pred_region
        %s598 = ssub.s32 %s23, 2
        // Predicated region
        $region85: #{tpu_custom_call.1} parent=83 // pred_check
          %p599 = pneg %p162
        $region86: #{tpu_custom_call.1} parent=83 // pred_check_branch
          %601 = sbr.rel (%p599) target = $region88
        $region87: #{tpu_custom_call.1} parent=83 // pred_region
          %s602 = sand.u32 %s147, 1
          %s603 = scalar_lea.sflag [#allocation5], %s602
          %s604 = sand.u32 %s147, 1
          %s605 = smul.addr %s604, 8
          %s606 = scalar_lea.vmem [#allocation13], %s605
          %607 = dma.done %s603, 128
        $region88: #{tpu_custom_call.1} parent=83 // pred_fallthru
          _
      $region84: #{tpu_custom_call.1} parent=5 // pred_fallthru
        _
    $region6: #{tpu_custom_call.1} parent=1 // loop_footer
      %s27 = sadd.s32 1, %s23
    $region7: #{tpu_custom_call.1} parent=1 // loop_footer_branch
      %22 = sbr.rel target = $region3
    $region8: #{tpu_custom_call.1} parent=1 // loop_exit
      _
    %608 = vsyncpa [#allocation4], 1
    %s609 = scalar_lea.sflag [#allocation4], 1
    %610 = vsyncpa %s609, 1
    %611 = vsyncpa [#allocation9], 1
    %612 = vsyncpa [#allocation12], 1
    %613 = vsyncpa [#allocation5], 1
    %s614 = scalar_lea.sflag [#allocation5], 1
    %615 = vsyncpa %s614, 1
    %616 = vsyncpa [#allocation15], 1
    %617 = vsyncpa [#allocation6], 1
    %s618 = scalar_lea.sflag [#allocation6], 1
    %619 = vsyncpa %s618, 1

</llo_original>
